<compile_context>
chip_gen: v5e
topology: v5e:2x2
jax: 0.10.0
libtpu: 0.0.40
codegen_flags: <defaults>
</compile_context>

<pallas_src>
import numpy as np
import jax
import jax.numpy as jnp
from jax import lax
from jax.experimental import pallas as pl
from jax.experimental.pallas import tpu as pltpu

B = 2          # batch
L = 16         # block length (sequence)
K = 4          # args.code_rate_k   (input channels)
U = 32         # args.enc_num_unit  (conv channels)
KS = 5         # args.enc_kernel_size
NUM_LAYER = 2  # args.enc_num_layer
PAD = KS // 2
NB = 3         # number of encoder branches (sys, p1, p2)

C0 = 2 * K     # layer-0 fused input channels: [original K | interleaved K]
CH = NB * U    # fused hidden width (all three branches side by side)
LANES = 128    # lane-dense parameter slab width


def _a8(x):
    return (x + 7) // 8 * 8


# ---- row offsets inside the single packed parameter slab (all 8-aligned) ----
R_W0 = 0                                    # (KS*C0, CH) = (40, 96)
R_B0 = R_W0 + KS * C0                       # 40, one row
R_WH = _a8(R_B0 + 1)                        # 48
HID_BLOCK = _a8(KS * CH + 1)                # 488 rows per hidden layer (W + bias)
R_WL = R_WH + (NUM_LAYER - 1) * HID_BLOCK   # 536, (CH, NB) head weights
R_BL = R_WL + CH                            # 632, one row
R_PERM = _a8(R_BL + 1)                      # 640, (L, L) one-hot interleaver
N_ROWS = _a8(R_PERM + L)                    # 656


def _elu(x):
    return jnp.where(x > 0, x, jnp.exp(jnp.minimum(x, 0.0)) - 1.0)


def _fused_enc_kernel(x_ref, p_ref, o_ref, pad_ref):
    """Whole ENC_interCNN forward (3 branches + power constraint) in one shot.

    x_ref:   (B, L, K)       input bits
    p_ref:   (N_ROWS, 128)   packed parameter slab (weights, biases, interleaver)
    o_ref:   (B, L, NB)      normalized codes
    pad_ref: (B, L+2*PAD, CH) VMEM scratch for 'same' padding (pad rows stay 0)
    """
    # ---- static slices of the packed parameter slab ----
    W0 = p_ref[R_W0:R_W0 + KS * C0, 0:CH]            # (40, 96)
    b0 = p_ref[R_B0:R_B0 + 1, 0:CH]                  # (1, 96)
    Wl = p_ref[R_WL:R_WL + CH, 0:NB]                 # (96, 3) block-diag heads
    bl = p_ref[R_BL:R_BL + 1, 0:NB]                  # (1, 3)
    perm = p_ref[R_PERM:R_PERM + L, 0:L]             # (16, 16)

    # zero the padding scratch once; only rows [PAD, PAD+L) are ever rewritten
    pad_ref[...] = jnp.zeros_like(pad_ref)

    x = x_ref[...]                                   # (B, L, K)
    xb = 2.0 * x - 1.0

    # interleaver for both batches in one (L, L) @ (L, B*K) matmul
    x_lk = jnp.concatenate([xb[0], xb[1]], axis=1)                        # (16, 8)
    xint = jnp.dot(perm, x_lk, preferred_element_type=jnp.float32)        # (16, 8)

    # layer-0 input per batch: channels [original K | interleaved K]
    for b in range(B):
        u_b = jnp.concatenate([xb[b], xint[:, b * K:(b + 1) * K]], axis=1)  # (16, 8)
        pad_ref[b, PAD:PAD + L, 0:C0] = u_b

    def build_cols(cin):
        # im2col: KS shifted static slices (lane concat) per batch, batch rows
        # stacked on the sublane axis (both blocks are 8-aligned -> no retiling).
        per_b = []
        for b in range(B):
            views = [pad_ref[b, k:k + L, 0:cin] for k in range(KS)]
            per_b.append(jnp.concatenate(views, axis=1))                  # (L, KS*cin)
        return jnp.concatenate(per_b, axis=0)                             # (B*L, KS*cin)

    # layer 0: all 3 branches & both batches in ONE (32, 40) @ (40, 96) matmul
    h = _elu(jnp.dot(build_cols(C0), W0, preferred_element_type=jnp.float32) + b0)

    # hidden layers: block-diagonal (480, 96) weight -> one matmul per layer
    for layer in range(NUM_LAYER - 1):
        base = R_WH + layer * HID_BLOCK
        Wh = p_ref[base:base + KS * CH, 0:CH]                             # (480, 96)
        bh = p_ref[base + KS * CH:base + KS * CH + 1, 0:CH]               # (1, 96)
        for b in range(B):
            pad_ref[b, PAD:PAD + L, 0:CH] = h[b * L:(b + 1) * L, :]
        h = _elu(jnp.dot(build_cols(CH), Wh, preferred_element_type=jnp.float32) + bh)

    # fused Linear(U,1) heads (block-diagonal) + enc_act (elu)
    y = _elu(jnp.dot(h, Wl, preferred_element_type=jnp.float32) + bl)     # (32, 3)

    # power constraint on register-held values (torch.std -> ddof=1); store once
    n = B * L * NB
    mean = jnp.sum(y) / n
    c = y - mean
    var = jnp.sum(c * c) / (n - 1)
    y_norm = c * lax.rsqrt(var)
    o_ref[0] = y_norm[0:L]
    o_ref[1] = y_norm[L:2 * L]


def pack_params(params, p_array_np):
    """Pack all branch parameters + interleaver into one lane-dense f32 slab."""
    slab = np.zeros((N_ROWS, LANES), np.float32)
    for br, p in enumerate(params):
        w0 = np.asarray(p[0], np.float32)                      # (KS, K, U)
        b0 = np.asarray(p[1], np.float32).reshape(U)
        wh = np.asarray(p[2], np.float32)                      # (NUM_LAYER-1, KS, U, U)
        bh = np.asarray(p[3], np.float32).reshape(NUM_LAYER - 1, U)
        wl = np.asarray(p[4], np.float32).reshape(U)
        bl = np.asarray(p[5], np.float32).reshape(())
        cin_off = 0 if br < 2 else K          # branch 3 reads the interleaved channels
        for k in range(KS):
            slab[R_W0 + k * C0 + cin_off: R_W0 + k * C0 + cin_off + K,
                 br * U:(br + 1) * U] = w0[k]
        slab[R_B0, br * U:(br + 1) * U] = b0
        for l in range(NUM_LAYER - 1):
            base = R_WH + l * HID_BLOCK
            for k in range(KS):
                slab[base + k * CH + br * U: base + k * CH + (br + 1) * U,
                     br * U:(br + 1) * U] = wh[l, k]
            slab[base + KS * CH, br * U:(br + 1) * U] = bh[l]
        slab[R_WL + br * U: R_WL + (br + 1) * U, br] = wl
        slab[R_BL, br] = bl
    # one-hot interleaver: (perm @ v)[i] == v[p_array[i]]
    slab[R_PERM:R_PERM + L, :L] = np.eye(L, dtype=np.float32)[np.asarray(p_array_np)]
    return jnp.asarray(slab)


@jax.jit
def enc_intercnn_forward(x, param_slab):
    return pl.pallas_call(
        _fused_enc_kernel,
        out_shape=jax.ShapeDtypeStruct((B, L, NB), jnp.float32),
        scratch_shapes=[pltpu.VMEM((B, L + 2 * PAD, CH), jnp.float32)],
    )(x, param_slab)


# ---------------- numpy reference (mirrors the PyTorch semantics) -------------
def _elu_np(x):
    return np.where(x > 0, x, np.exp(np.minimum(x, 0.0)) - 1.0)


def _conv_same_np(x, w, b):
    ks, cin, cout = w.shape
    pad = ks // 2
    Lx = x.shape[0]
    xp = np.zeros((Lx + 2 * pad, cin), np.float32)
    xp[pad:pad + Lx] = x
    out = np.zeros((Lx, cout), np.float32)
    for k in range(ks):
        out = out + xp[k:k + Lx] @ w[k]
    return _elu_np(out + b)


def _forward_np(x, params, p_array):
    def branch(xb, w0, b0, wh, bh, wl, bl):
        h = _conv_same_np(2.0 * xb - 1.0, w0, b0[0])
        for l in range(wh.shape[0]):
            h = _conv_same_np(h, wh[l], bh[l, 0])
        return _elu_np(h @ wl + bl)

    branch_in = [x, x, x[:, p_array, :]]
    outs = []
    for xi, p in zip(branch_in, params):
        p = [np.asarray(t) for t in p]
        outs.append(np.stack([branch(xi[b], *p) for b in range(x.shape[0])], 0))
    x_tx = np.concatenate(outs, axis=2)
    return (x_tx - x_tx.mean()) / x_tx.std(ddof=1)


if __name__ == "__main__":
    key = jax.random.PRNGKey(0)
    kx, kp = jax.random.split(key)

    # binary message bits (B, L, K), as in TurboAE
    x = jax.random.bernoulli(kx, 0.5, (B, L, K)).astype(jnp.float32)

    # deterministic interleaver permutation p_array
    p_array_np = np.random.RandomState(0).permutation(L).astype(np.int32)

    # deterministic parameter init for the 3 branches (enc_cnn_i + enc_linear_i)
    params = []
    for i in range(NB):
        ks_ = jax.random.split(jax.random.fold_in(kp, i), 6)
        params.append((
            0.3 * jax.random.normal(ks_[0], (KS, K, U), jnp.float32),                 # conv layer 0 W
            0.1 * jax.random.normal(ks_[1], (1, U), jnp.float32),                     # conv layer 0 b
            0.1 * jax.random.normal(ks_[2], (NUM_LAYER - 1, KS, U, U), jnp.float32),  # hidden conv W
            0.1 * jax.random.normal(ks_[3], (NUM_LAYER - 1, 1, U), jnp.float32),      # hidden conv b
            0.3 * jax.random.normal(ks_[4], (U, 1), jnp.float32),                     # linear W (transposed)
            0.1 * jax.random.normal(ks_[5], (1, 1), jnp.float32),                     # linear b
        ))

    param_slab = pack_params(params, p_array_np)
    codes = enc_intercnn_forward(x, param_slab)
    codes = jax.block_until_ready(codes)

    ref = _forward_np(np.asarray(x), params, p_array_np)
    np.testing.assert_allclose(np.asarray(codes), ref, rtol=2e-2, atol=2e-2)
    print("KERNEL_OK")
</pallas_src>

<mosaic_0001>
module attributes {stable_mosaic.version = 11 : i64} {
  func.func @_fused_enc_kernel(%arg0: memref<2x16x4xf32, #tpu.memory_space<vmem>>, %arg1: memref<656x128xf32, #tpu.memory_space<vmem>>, %arg2: memref<2x16x3xf32, #tpu.memory_space<vmem>>, %arg3: memref<2x20x96xf32, #tpu.memory_space<vmem>>) attributes {dimension_semantics = [], scalar_prefetch = 0 : i64, scratch_operands = 1 : i64, tpu.core_type = #tpu.core_type<tc>} {
    %c0 = arith.constant 0 : index
    %c0_0 = arith.constant 0 : index
    %0 = vector.load %arg1[%c0, %c0_0] : memref<656x128xf32, #tpu.memory_space<vmem>>, vector<40x96xf32>
    %c40 = arith.constant 40 : index
    %c0_1 = arith.constant 0 : index
    %1 = vector.load %arg1[%c40, %c0_1] : memref<656x128xf32, #tpu.memory_space<vmem>>, vector<1x96xf32>
    %c536 = arith.constant 536 : index
    %c0_2 = arith.constant 0 : index
    %2 = vector.load %arg1[%c536, %c0_2] : memref<656x128xf32, #tpu.memory_space<vmem>>, vector<96x3xf32>
    %c632 = arith.constant 632 : index
    %c0_3 = arith.constant 0 : index
    %3 = vector.load %arg1[%c632, %c0_3] : memref<656x128xf32, #tpu.memory_space<vmem>>, vector<1x3xf32>
    %c640 = arith.constant 640 : index
    %c0_4 = arith.constant 0 : index
    %4 = vector.load %arg1[%c640, %c0_4] : memref<656x128xf32, #tpu.memory_space<vmem>>, vector<16x16xf32>
    %cst = arith.constant 0.000000e+00 : f32
    %5 = vector.broadcast %cst : f32 to vector<2x20x96xf32>
    %c0_5 = arith.constant 0 : index
    %c0_6 = arith.constant 0 : index
    %c0_7 = arith.constant 0 : index
    %6 = vector.load %arg3[%c0_5, %c0_6, %c0_7] : memref<2x20x96xf32, #tpu.memory_space<vmem>>, vector<2x20x96xf32>
    tpu.vector_store %arg3[%c0_5, %c0_6, %c0_7], %5 {strides = array<i32>} : memref<2x20x96xf32, #tpu.memory_space<vmem>>, vector<2x20x96xf32>,
    %c0_8 = arith.constant 0 : index
    %c0_9 = arith.constant 0 : index
    %c0_10 = arith.constant 0 : index
    %7 = vector.load %arg0[%c0_8, %c0_9, %c0_10] : memref<2x16x4xf32, #tpu.memory_space<vmem>>, vector<2x16x4xf32>
    %cst_11 = arith.constant 2.000000e+00 : f32
    %8 = vector.broadcast %cst_11 : f32 to vector<2x16x4xf32>
    %9 = arith.mulf %8, %7 : vector<2x16x4xf32>
    %cst_12 = arith.constant 1.000000e+00 : f32
    %10 = vector.broadcast %cst_12 : f32 to vector<2x16x4xf32>
    %11 = arith.subf %9, %10 : vector<2x16x4xf32>
    %12 = vector.extract_strided_slice %11 {offsets = [0, 0, 0], sizes = [1, 16, 4], strides = [1, 1, 1]} : vector<2x16x4xf32> to vector<1x16x4xf32>
    %13 = vector.shape_cast %12 : vector<1x16x4xf32> to vector<16x4xf32>
    %14 = vector.extract_strided_slice %11 {offsets = [1, 0, 0], sizes = [1, 16, 4], strides = [1, 1, 1]} : vector<2x16x4xf32> to vector<1x16x4xf32>
    %15 = vector.shape_cast %14 : vector<1x16x4xf32> to vector<16x4xf32>
    %16 = tpu.concatenate %13, %15 in 1 : vector<16x4xf32>, vector<16x4xf32> -> vector<16x8xf32>
    %cst_13 = arith.constant dense<0.000000e+00> : vector<16x8xf32>
    %17 = tpu.matmul %4, %16, %cst_13 {dimension_numbers = #tpu.dot_dimension_numbers<[1], [0], [0], [1], [0, 0, 1, 1], [], []>} : vector<16x16xf32>, vector<16x8xf32>, vector<16x8xf32> -> vector<16x8xf32>
    %18 = vector.extract_strided_slice %11 {offsets = [0, 0, 0], sizes = [1, 16, 4], strides = [1, 1, 1]} : vector<2x16x4xf32> to vector<1x16x4xf32>
    %19 = vector.shape_cast %18 : vector<1x16x4xf32> to vector<16x4xf32>
    %20 = vector.extract_strided_slice %17 {offsets = [0, 0], sizes = [16, 4], strides = [1, 1]} : vector<16x8xf32> to vector<16x4xf32>
    %21 = tpu.concatenate %19, %20 in 1 : vector<16x4xf32>, vector<16x4xf32> -> vector<16x8xf32>
    %c0_14 = arith.constant 0 : index
    %c2 = arith.constant 2 : index
    %c0_15 = arith.constant 0 : index
    %22 = vector.load %arg3[%c0_14, %c2, %c0_15] : memref<2x20x96xf32, #tpu.memory_space<vmem>>, vector<1x16x8xf32>
    %23 = vector.shape_cast %22 : vector<1x16x8xf32> to vector<16x8xf32>
    %24 = vector.shape_cast %21 : vector<16x8xf32> to vector<1x16x8xf32>
    tpu.vector_store %arg3[%c0_14, %c2, %c0_15], %24 {strides = array<i32>} : memref<2x20x96xf32, #tpu.memory_space<vmem>>, vector<1x16x8xf32>,
    %25 = vector.extract_strided_slice %11 {offsets = [1, 0, 0], sizes = [1, 16, 4], strides = [1, 1, 1]} : vector<2x16x4xf32> to vector<1x16x4xf32>
    %26 = vector.shape_cast %25 : vector<1x16x4xf32> to vector<16x4xf32>
    %27 = vector.extract_strided_slice %17 {offsets = [0, 4], sizes = [16, 4], strides = [1, 1]} : vector<16x8xf32> to vector<16x4xf32>
    %28 = tpu.concatenate %26, %27 in 1 : vector<16x4xf32>, vector<16x4xf32> -> vector<16x8xf32>
    %c1 = arith.constant 1 : index
    %c2_16 = arith.constant 2 : index
    %c0_17 = arith.constant 0 : index
    %29 = vector.load %arg3[%c1, %c2_16, %c0_17] : memref<2x20x96xf32, #tpu.memory_space<vmem>>, vector<1x16x8xf32>
    %30 = vector.shape_cast %29 : vector<1x16x8xf32> to vector<16x8xf32>
    %31 = vector.shape_cast %28 : vector<16x8xf32> to vector<1x16x8xf32>
    tpu.vector_store %arg3[%c1, %c2_16, %c0_17], %31 {strides = array<i32>} : memref<2x20x96xf32, #tpu.memory_space<vmem>>, vector<1x16x8xf32>,
    %c0_18 = arith.constant 0 : index
    %c0_19 = arith.constant 0 : index
    %c0_20 = arith.constant 0 : index
    %32 = vector.load %arg3[%c0_18, %c0_19, %c0_20] : memref<2x20x96xf32, #tpu.memory_space<vmem>>, vector<1x16x8xf32>
    %33 = vector.shape_cast %32 : vector<1x16x8xf32> to vector<16x8xf32>
    %c0_21 = arith.constant 0 : index
    %c1_22 = arith.constant 1 : index
    %c0_23 = arith.constant 0 : index
    %34 = vector.load %arg3[%c0_21, %c1_22, %c0_23] : memref<2x20x96xf32, #tpu.memory_space<vmem>>, vector<1x16x8xf32>
    %35 = vector.shape_cast %34 : vector<1x16x8xf32> to vector<16x8xf32>
    %c0_24 = arith.constant 0 : index
    %c2_25 = arith.constant 2 : index
    %c0_26 = arith.constant 0 : index
    %36 = vector.load %arg3[%c0_24, %c2_25, %c0_26] : memref<2x20x96xf32, #tpu.memory_space<vmem>>, vector<1x16x8xf32>
    %37 = vector.shape_cast %36 : vector<1x16x8xf32> to vector<16x8xf32>
    %c0_27 = arith.constant 0 : index
    %c3 = arith.constant 3 : index
    %c0_28 = arith.constant 0 : index
    %38 = vector.load %arg3[%c0_27, %c3, %c0_28] : memref<2x20x96xf32, #tpu.memory_space<vmem>>, vector<1x16x8xf32>
    %39 = vector.shape_cast %38 : vector<1x16x8xf32> to vector<16x8xf32>
    %c0_29 = arith.constant 0 : index
    %c4 = arith.constant 4 : index
    %c0_30 = arith.constant 0 : index
    %40 = vector.load %arg3[%c0_29, %c4, %c0_30] : memref<2x20x96xf32, #tpu.memory_space<vmem>>, vector<1x16x8xf32>
    %41 = vector.shape_cast %40 : vector<1x16x8xf32> to vector<16x8xf32>
    %42 = tpu.concatenate %33, %35, %37, %39, %41 in 1 : vector<16x8xf32>, vector<16x8xf32>, vector<16x8xf32>, vector<16x8xf32>, vector<16x8xf32> -> vector<16x40xf32>
    %c1_31 = arith.constant 1 : index
    %c0_32 = arith.constant 0 : index
    %c0_33 = arith.constant 0 : index
    %43 = vector.load %arg3[%c1_31, %c0_32, %c0_33] : memref<2x20x96xf32, #tpu.memory_space<vmem>>, vector<1x16x8xf32>
    %44 = vector.shape_cast %43 : vector<1x16x8xf32> to vector<16x8xf32>
    %c1_34 = arith.constant 1 : index
    %c1_35 = arith.constant 1 : index
    %c0_36 = arith.constant 0 : index
    %45 = vector.load %arg3[%c1_34, %c1_35, %c0_36] : memref<2x20x96xf32, #tpu.memory_space<vmem>>, vector<1x16x8xf32>
    %46 = vector.shape_cast %45 : vector<1x16x8xf32> to vector<16x8xf32>
    %c1_37 = arith.constant 1 : index
    %c2_38 = arith.constant 2 : index
    %c0_39 = arith.constant 0 : index
    %47 = vector.load %arg3[%c1_37, %c2_38, %c0_39] : memref<2x20x96xf32, #tpu.memory_space<vmem>>, vector<1x16x8xf32>
    %48 = vector.shape_cast %47 : vector<1x16x8xf32> to vector<16x8xf32>
    %c1_40 = arith.constant 1 : index
    %c3_41 = arith.constant 3 : index
    %c0_42 = arith.constant 0 : index
    %49 = vector.load %arg3[%c1_40, %c3_41, %c0_42] : memref<2x20x96xf32, #tpu.memory_space<vmem>>, vector<1x16x8xf32>
    %50 = vector.shape_cast %49 : vector<1x16x8xf32> to vector<16x8xf32>
    %c1_43 = arith.constant 1 : index
    %c4_44 = arith.constant 4 : index
    %c0_45 = arith.constant 0 : index
    %51 = vector.load %arg3[%c1_43, %c4_44, %c0_45] : memref<2x20x96xf32, #tpu.memory_space<vmem>>, vector<1x16x8xf32>
    %52 = vector.shape_cast %51 : vector<1x16x8xf32> to vector<16x8xf32>
    %53 = tpu.concatenate %44, %46, %48, %50, %52 in 1 : vector<16x8xf32>, vector<16x8xf32>, vector<16x8xf32>, vector<16x8xf32>, vector<16x8xf32> -> vector<16x40xf32>
    %54 = tpu.concatenate %42, %53 in 0 : vector<16x40xf32>, vector<16x40xf32> -> vector<32x40xf32>
    %cst_46 = arith.constant dense<0.000000e+00> : vector<32x96xf32>
    %55 = tpu.matmul %54, %0, %cst_46 {dimension_numbers = #tpu.dot_dimension_numbers<[1], [0], [0], [1], [0, 0, 1, 1], [], []>} : vector<32x40xf32>, vector<40x96xf32>, vector<32x96xf32> -> vector<32x96xf32>
    %56 = vector.broadcast %1 : vector<1x96xf32> to vector<32x96xf32>
    %57 = arith.addf %55, %56 : vector<32x96xf32>
    %cst_47 = arith.constant 0.000000e+00 : f32
    %58 = vector.broadcast %cst_47 : f32 to vector<32x96xf32>
    %59 = arith.cmpf ogt, %57, %58 : vector<32x96xf32>
    %cst_48 = arith.constant 0.000000e+00 : f32
    %60 = vector.broadcast %cst_48 : f32 to vector<32x96xf32>
    %61 = arith.minimumf %57, %60 : vector<32x96xf32>
    %62 = math.exp %61 : vector<32x96xf32>
    %cst_49 = arith.constant 1.000000e+00 : f32
    %63 = vector.broadcast %cst_49 : f32 to vector<32x96xf32>
    %64 = arith.subf %62, %63 : vector<32x96xf32>
    %65 = arith.select %59, %57, %64 : vector<32x96xi1>, vector<32x96xf32>
    %c48 = arith.constant 48 : index
    %c0_50 = arith.constant 0 : index
    %66 = vector.load %arg1[%c48, %c0_50] : memref<656x128xf32, #tpu.memory_space<vmem>>, vector<480x96xf32>
    %c528 = arith.constant 528 : index
    %c0_51 = arith.constant 0 : index
    %67 = vector.load %arg1[%c528, %c0_51] : memref<656x128xf32, #tpu.memory_space<vmem>>, vector<1x96xf32>
    %68 = vector.extract_strided_slice %65 {offsets = [0, 0], sizes = [16, 96], strides = [1, 1]} : vector<32x96xf32> to vector<16x96xf32>
    %c0_52 = arith.constant 0 : index
    %c2_53 = arith.constant 2 : index
    %c0_54 = arith.constant 0 : index
    %69 = vector.load %arg3[%c0_52, %c2_53, %c0_54] : memref<2x20x96xf32, #tpu.memory_space<vmem>>, vector<1x16x96xf32>
    %70 = vector.shape_cast %69 : vector<1x16x96xf32> to vector<16x96xf32>
    %71 = vector.shape_cast %68 : vector<16x96xf32> to vector<1x16x96xf32>
    tpu.vector_store %arg3[%c0_52, %c2_53, %c0_54], %71 {strides = array<i32>} : memref<2x20x96xf32, #tpu.memory_space<vmem>>, vector<1x16x96xf32>,
    %72 = vector.extract_strided_slice %65 {offsets = [16, 0], sizes = [16, 96], strides = [1, 1]} : vector<32x96xf32> to vector<16x96xf32>
    %c1_55 = arith.constant 1 : index
    %c2_56 = arith.constant 2 : index
    %c0_57 = arith.constant 0 : index
    %73 = vector.load %arg3[%c1_55, %c2_56, %c0_57] : memref<2x20x96xf32, #tpu.memory_space<vmem>>, vector<1x16x96xf32>
    %74 = vector.shape_cast %73 : vector<1x16x96xf32> to vector<16x96xf32>
    %75 = vector.shape_cast %72 : vector<16x96xf32> to vector<1x16x96xf32>
    tpu.vector_store %arg3[%c1_55, %c2_56, %c0_57], %75 {strides = array<i32>} : memref<2x20x96xf32, #tpu.memory_space<vmem>>, vector<1x16x96xf32>,
    %c0_58 = arith.constant 0 : index
    %c0_59 = arith.constant 0 : index
    %c0_60 = arith.constant 0 : index
    %76 = vector.load %arg3[%c0_58, %c0_59, %c0_60] : memref<2x20x96xf32, #tpu.memory_space<vmem>>, vector<1x16x96xf32>
    %77 = vector.shape_cast %76 : vector<1x16x96xf32> to vector<16x96xf32>
    %c0_61 = arith.constant 0 : index
    %c1_62 = arith.constant 1 : index
    %c0_63 = arith.constant 0 : index
    %78 = vector.load %arg3[%c0_61, %c1_62, %c0_63] : memref<2x20x96xf32, #tpu.memory_space<vmem>>, vector<1x16x96xf32>
    %79 = vector.shape_cast %78 : vector<1x16x96xf32> to vector<16x96xf32>
    %c0_64 = arith.constant 0 : index
    %c2_65 = arith.constant 2 : index
    %c0_66 = arith.constant 0 : index
    %80 = vector.load %arg3[%c0_64, %c2_65, %c0_66] : memref<2x20x96xf32, #tpu.memory_space<vmem>>, vector<1x16x96xf32>
    %81 = vector.shape_cast %80 : vector<1x16x96xf32> to vector<16x96xf32>
    %c0_67 = arith.constant 0 : index
    %c3_68 = arith.constant 3 : index
    %c0_69 = arith.constant 0 : index
    %82 = vector.load %arg3[%c0_67, %c3_68, %c0_69] : memref<2x20x96xf32, #tpu.memory_space<vmem>>, vector<1x16x96xf32>
    %83 = vector.shape_cast %82 : vector<1x16x96xf32> to vector<16x96xf32>
    %c0_70 = arith.constant 0 : index
    %c4_71 = arith.constant 4 : index
    %c0_72 = arith.constant 0 : index
    %84 = vector.load %arg3[%c0_70, %c4_71, %c0_72] : memref<2x20x96xf32, #tpu.memory_space<vmem>>, vector<1x16x96xf32>
    %85 = vector.shape_cast %84 : vector<1x16x96xf32> to vector<16x96xf32>
    %86 = tpu.concatenate %77, %79, %81, %83, %85 in 1 : vector<16x96xf32>, vector<16x96xf32>, vector<16x96xf32>, vector<16x96xf32>, vector<16x96xf32> -> vector<16x480xf32>
    %c1_73 = arith.constant 1 : index
    %c0_74 = arith.constant 0 : index
    %c0_75 = arith.constant 0 : index
    %87 = vector.load %arg3[%c1_73, %c0_74, %c0_75] : memref<2x20x96xf32, #tpu.memory_space<vmem>>, vector<1x16x96xf32>
    %88 = vector.shape_cast %87 : vector<1x16x96xf32> to vector<16x96xf32>
    %c1_76 = arith.constant 1 : index
    %c1_77 = arith.constant 1 : index
    %c0_78 = arith.constant 0 : index
    %89 = vector.load %arg3[%c1_76, %c1_77, %c0_78] : memref<2x20x96xf32, #tpu.memory_space<vmem>>, vector<1x16x96xf32>
    %90 = vector.shape_cast %89 : vector<1x16x96xf32> to vector<16x96xf32>
    %c1_79 = arith.constant 1 : index
    %c2_80 = arith.constant 2 : index
    %c0_81 = arith.constant 0 : index
    %91 = vector.load %arg3[%c1_79, %c2_80, %c0_81] : memref<2x20x96xf32, #tpu.memory_space<vmem>>, vector<1x16x96xf32>
    %92 = vector.shape_cast %91 : vector<1x16x96xf32> to vector<16x96xf32>
    %c1_82 = arith.constant 1 : index
    %c3_83 = arith.constant 3 : index
    %c0_84 = arith.constant 0 : index
    %93 = vector.load %arg3[%c1_82, %c3_83, %c0_84] : memref<2x20x96xf32, #tpu.memory_space<vmem>>, vector<1x16x96xf32>
    %94 = vector.shape_cast %93 : vector<1x16x96xf32> to vector<16x96xf32>
    %c1_85 = arith.constant 1 : index
    %c4_86 = arith.constant 4 : index
    %c0_87 = arith.constant 0 : index
    %95 = vector.load %arg3[%c1_85, %c4_86, %c0_87] : memref<2x20x96xf32, #tpu.memory_space<vmem>>, vector<1x16x96xf32>
    %96 = vector.shape_cast %95 : vector<1x16x96xf32> to vector<16x96xf32>
    %97 = tpu.concatenate %88, %90, %92, %94, %96 in 1 : vector<16x96xf32>, vector<16x96xf32>, vector<16x96xf32>, vector<16x96xf32>, vector<16x96xf32> -> vector<16x480xf32>
    %98 = tpu.concatenate %86, %97 in 0 : vector<16x480xf32>, vector<16x480xf32> -> vector<32x480xf32>
    %cst_88 = arith.constant dense<0.000000e+00> : vector<32x96xf32>
    %99 = tpu.matmul %98, %66, %cst_88 {dimension_numbers = #tpu.dot_dimension_numbers<[1], [0], [0], [1], [0, 0, 1, 1], [], []>} : vector<32x480xf32>, vector<480x96xf32>, vector<32x96xf32> -> vector<32x96xf32>
    %100 = vector.broadcast %67 : vector<1x96xf32> to vector<32x96xf32>
    %101 = arith.addf %99, %100 : vector<32x96xf32>
    %cst_89 = arith.constant 0.000000e+00 : f32
    %102 = vector.broadcast %cst_89 : f32 to vector<32x96xf32>
    %103 = arith.cmpf ogt, %101, %102 : vector<32x96xf32>
    %cst_90 = arith.constant 0.000000e+00 : f32
    %104 = vector.broadcast %cst_90 : f32 to vector<32x96xf32>
    %105 = arith.minimumf %101, %104 : vector<32x96xf32>
    %106 = math.exp %105 : vector<32x96xf32>
    %cst_91 = arith.constant 1.000000e+00 : f32
    %107 = vector.broadcast %cst_91 : f32 to vector<32x96xf32>
    %108 = arith.subf %106, %107 : vector<32x96xf32>
    %109 = arith.select %103, %101, %108 : vector<32x96xi1>, vector<32x96xf32>
    %cst_92 = arith.constant dense<0.000000e+00> : vector<32x3xf32>
    %110 = tpu.matmul %109, %2, %cst_92 {dimension_numbers = #tpu.dot_dimension_numbers<[1], [0], [0], [1], [0, 0, 1, 1], [], []>} : vector<32x96xf32>, vector<96x3xf32>, vector<32x3xf32> -> vector<32x3xf32>
    %111 = vector.broadcast %3 : vector<1x3xf32> to vector<32x3xf32>
    %112 = arith.addf %110, %111 : vector<32x3xf32>
    %cst_93 = arith.constant 0.000000e+00 : f32
    %113 = vector.broadcast %cst_93 : f32 to vector<32x3xf32>
    %114 = arith.cmpf ogt, %112, %113 : vector<32x3xf32>
    %cst_94 = arith.constant 0.000000e+00 : f32
    %115 = vector.broadcast %cst_94 : f32 to vector<32x3xf32>
    %116 = arith.minimumf %112, %115 : vector<32x3xf32>
    %117 = math.exp %116 : vector<32x3xf32>
    %cst_95 = arith.constant 1.000000e+00 : f32
    %118 = vector.broadcast %cst_95 : f32 to vector<32x3xf32>
    %119 = arith.subf %117, %118 : vector<32x3xf32>
    %120 = arith.select %114, %112, %119 : vector<32x3xi1>, vector<32x3xf32>
    %121 = vector.shape_cast %120 : vector<32x3xf32> to vector<1x32x3xf32>
    %cst_96 = arith.constant dense<0.000000e+00> : vector<1xf32>
    %122 = vector.multi_reduction <add>, %121, %cst_96 [1, 2] : vector<1x32x3xf32> to vector<1xf32>
    %123 = vector.shape_cast %122 : vector<1xf32> to vector<1x1x1xf32>
    %124 = vector.extract %123[0, 0, 0] : f32 from vector<1x1x1xf32>
    %cst_97 = arith.constant 9.600000e+01 : f32
    %125 = arith.divf %124, %cst_97 : f32
    %126 = vector.broadcast %125 : f32 to vector<32x3xf32>
    %127 = arith.subf %120, %126 : vector<32x3xf32>
    %128 = arith.mulf %127, %127 : vector<32x3xf32>
    %129 = vector.shape_cast %128 : vector<32x3xf32> to vector<1x32x3xf32>
    %cst_98 = arith.constant dense<0.000000e+00> : vector<1xf32>
    %130 = vector.multi_reduction <add>, %129, %cst_98 [1, 2] : vector<1x32x3xf32> to vector<1xf32>
    %131 = vector.shape_cast %130 : vector<1xf32> to vector<1x1x1xf32>
    %132 = vector.extract %131[0, 0, 0] : f32 from vector<1x1x1xf32>
    %cst_99 = arith.constant 9.500000e+01 : f32
    %133 = arith.divf %132, %cst_99 : f32
    %134 = math.rsqrt %133 : f32
    %135 = vector.broadcast %134 : f32 to vector<32x3xf32>
    %136 = arith.mulf %127, %135 : vector<32x3xf32>
    %137 = vector.extract_strided_slice %136 {offsets = [0, 0], sizes = [16, 3], strides = [1, 1]} : vector<32x3xf32> to vector<16x3xf32>
    %c0_100 = arith.constant 0 : index
    %c0_101 = arith.constant 0 : index
    %c0_102 = arith.constant 0 : index
    %138 = vector.load %arg2[%c0_100, %c0_101, %c0_102] : memref<2x16x3xf32, #tpu.memory_space<vmem>>, vector<1x16x3xf32>
    %139 = vector.shape_cast %138 : vector<1x16x3xf32> to vector<16x3xf32>
    %140 = vector.shape_cast %137 : vector<16x3xf32> to vector<1x16x3xf32>
    tpu.vector_store %arg2[%c0_100, %c0_101, %c0_102], %140 {strides = array<i32>} : memref<2x16x3xf32, #tpu.memory_space<vmem>>, vector<1x16x3xf32>,
    %141 = vector.extract_strided_slice %136 {offsets = [16, 0], sizes = [16, 3], strides = [1, 1]} : vector<32x3xf32> to vector<16x3xf32>
    %c1_103 = arith.constant 1 : index
    %c0_104 = arith.constant 0 : index
    %c0_105 = arith.constant 0 : index
    %142 = vector.load %arg2[%c1_103, %c0_104, %c0_105] : memref<2x16x3xf32, #tpu.memory_space<vmem>>, vector<1x16x3xf32>
    %143 = vector.shape_cast %142 : vector<1x16x3xf32> to vector<16x3xf32>
    %144 = vector.shape_cast %141 : vector<16x3xf32> to vector<1x16x3xf32>
    tpu.vector_store %arg2[%c1_103, %c0_104, %c0_105], %144 {strides = array<i32>} : memref<2x16x3xf32, #tpu.memory_space<vmem>>, vector<1x16x3xf32>,
    return
  }
}

</mosaic_0001>

<llo_original>
// kernel: enc_intercnn_forward.1
$region0: #{enc_intercnn_forward.1}
  #allocation0 [shape = 'u32[]', space=smem, size = 0x4, offset = 0x4, fixed_abs, tag = 'smem constant byte address 0x4 - core index']
  #allocation1 [shape = 'u32[72,128]{1,0:T(1,128)}', space=vmem, size = 0x9000, scoped, tag = 'internal scratch']
  #allocation2 [shape = 'f32[2,20,96]{2,1,0:T(8,128)}', space=vmem, size = 0x6000, scoped, tag = 'scratch operand']
  %s0 = inlined_call_operand.vmem [shape: f32[2,16,4], index: 0, kind: input, shape index: {}]
  %s1 = inlined_call_operand.hbm [shape: f32[656,128], index: 1, kind: input, shape index: {}]
  %s2 = inlined_call_operand.vmem [shape: f32[2,16,3], index: 2, kind: output, shape index: {}]
  %s3 = sld [smem:[#allocation0]]
  $region22: #{enc_intercnn_forward.1} parent=0
    _
  %s5 = ssub.s32 1, %s3
  %s6 = scalar_select 0, %s5, %s3
  $region1: #{enc_intercnn_forward.1} parent=0
    #allocation3 [shape = 'u8[335872]{0}', space=vmem, size = 0x52000, scoped, tag = 'input window, operand 1, single buffered']
    #allocation4 [shape = 's32[1]{0}', space=sflag, size = 0x4, scoped, tag = 'scoped memory for enc_intercnn_forward.1']
    %7 = vsyncpa [#allocation4], 0
    // Predicated region
    $region2: #{enc_intercnn_forward.1} parent=1 // pred_check
      _
    $region3: #{enc_intercnn_forward.1} parent=1 // pred_check_branch
      %9 = sbr.rel (0) target = $region5
    $region4: #{enc_intercnn_forward.1} parent=1 // pred_region
      _
    $region5: #{enc_intercnn_forward.1} parent=1 // pred_fallthru
      _
    // Predicated region
    $region6: #{enc_intercnn_forward.1} parent=1 // pred_check
      _
    $region7: #{enc_intercnn_forward.1} parent=1 // pred_check_branch
      %11 = sbr.rel (0) target = $region9
    $region8: #{enc_intercnn_forward.1} parent=1 // pred_region
      %13 = vsyncadd [#allocation4], 0
      %s14 = sshll.u32 %s1, 4
      %s15 = int_to_ptr.hbm [resolvable:$true] %s14
      %s16 = sshll.u32 [#allocation3], 4
      %s17 = int_to_ptr.vmem [resolvable:$true] %s16
      %22 = dma.hbm_to_vmem [thread:$0]  %s15, 10496, %s17, [#allocation4], 128, 128, 8
    $region9: #{enc_intercnn_forward.1} parent=1 // pred_fallthru
      _
    // Predicated region
    $region10: #{enc_intercnn_forward.1} parent=1 // pred_check
      _
    $region11: #{enc_intercnn_forward.1} parent=1 // pred_check_branch
      %24 = sbr.rel (0) target = $region13
    $region12: #{enc_intercnn_forward.1} parent=1 // pred_region
      %26 = dma.done [#allocation4], 10496
    $region13: #{enc_intercnn_forward.1} parent=1 // pred_fallthru
      _
    %v27 = vld [vmem:[#allocation3] sm:$0xff]
    %v28 = vld [vmem:[#allocation3 + $0x8] sm:$0xff]
    %v29 = vld [vmem:[#allocation3 + $0x10] sm:$0xff]
    %v30 = vld [vmem:[#allocation3 + $0x18] sm:$0xff]
    %v31 = vld [vmem:[#allocation3 + $0x20] sm:$0xff]
    %v32 = vld [vmem:[#allocation3 + $0x28] sm:$0x1]
    %v33 = vld [vmem:[#allocation3 + $0x218] sm:$0xff]
    %v34 = vld [vmem:[#allocation3 + $0x220] sm:$0xff]
    %v35 = vld [vmem:[#allocation3 + $0x228] sm:$0xff]
    %v36 = vld [vmem:[#allocation3 + $0x230] sm:$0xff]
    %v37 = vld [vmem:[#allocation3 + $0x238] sm:$0xff]
    %v38 = vld [vmem:[#allocation3 + $0x240] sm:$0xff]
    %v39 = vld [vmem:[#allocation3 + $0x248] sm:$0xff]
    %v40 = vld [vmem:[#allocation3 + $0x250] sm:$0xff]
    %v41 = vld [vmem:[#allocation3 + $0x258] sm:$0xff]
    %v42 = vld [vmem:[#allocation3 + $0x260] sm:$0xff]
    %v43 = vld [vmem:[#allocation3 + $0x268] sm:$0xff]
    %v44 = vld [vmem:[#allocation3 + $0x270] sm:$0xff]
    %v45 = vld [vmem:[#allocation3 + $0x278] sm:$0x1]
    %v46 = vld [vmem:[#allocation3 + $0x280] sm:$0xff]
    %v47 = vld [vmem:[#allocation3 + $0x288] sm:$0xff]
    %vm48 = vcmask 785408
    %49 = vst.msk [vmem:[#allocation2] sm:$0xff] %vm48, 0.0
    %50 = vst.msk [vmem:[#allocation2 + $0x8] sm:$0xff] %vm48, 0.0
    %vm51 = vcmask 781312
    %52 = vst.msk [vmem:[#allocation2 + $0x10] sm:$0xf] %vm51, 0.0
    %53 = vst.msk [vmem:[#allocation2 + $0x18] sm:$0xff] %vm48, 0.0
    %54 = vst.msk [vmem:[#allocation2 + $0x20] sm:$0xff] %vm48, 0.0
    %55 = vst.msk [vmem:[#allocation2 + $0x28] sm:$0xf] %vm51, 0.0
    %v56 = vld [vmem:[%s0] sm:$0xff]
    %v57 = vld [vmem:[%s0 + $0x8] sm:$0xff]
    %v58 = vld [vmem:[%s0 + $0x10] sm:$0xff]
    %v59 = vld [vmem:[%s0 + $0x18] sm:$0xff]
    %v60 = vmul.f32 %v56, 2.0
    %v61 = vmul.f32 %v57, 2.0
    %v62 = vmul.f32 %v58, 2.0
    %v63 = vmul.f32 %v59, 2.0
    %v64 = vsub.f32 %v60, 1.0
    %v65 = vsub.f32 %v61, 1.0
    %v66 = vsub.f32 %v62, 1.0
    %v67 = vsub.f32 %v63, 1.0
    %70 = vrot.lane.b32.xlu0 %v66, 4
    %v71 = vpop.permute.xlu0 %70
    %72 = vrot.lane.b32.xlu0 %v67, 4
    %v73 = vpop.permute.xlu0 %72
    %vm76 = vcmask 31744
    %v77 = vsel %vm76, %v64, %v71
    %v78 = vsel %vm76, %v65, %v73
    %vm79 = vcmask 130048
    %v81 = vsel %vm79, %v46, 0
    %v84 = vsel %vm79, %v47, 0
    %86 = vmatpush.msra.mxu0 0.0
    %87 = vmatpush.msra.mxu0 0.0
    %88 = vmatpush.msra.mxu0 0.0
    %89 = vmatpush.msra.mxu0 0.0
    %90 = vmatpush.msra.mxu0 0.0
    %91 = vmatpush.msra.mxu0 0.0
    %92 = vmatpush.msra.mxu0 0.0
    %93 = vmatpush.msra.mxu0 0.0
    %94 = vmatpush.msra.mxu0 0.0
    %95 = vmatpush.msra.mxu0 0.0
    %96 = vmatpush.msra.mxu0 0.0
    %97 = vmatpush.msra.mxu0 0.0
    %98 = vmatpush.msra.mxu0 0.0
    %99 = vmatpush.msra.mxu0 0.0
    %100 = vmatpush.msra.mxu0 %v78
    %101 = vmatpush.msra.mxu0 %v77
    %102 = vmatmul.f32.gmra.mxu0 %v81
    %v103 = vpop.f32.mrf.mxu0
    %v104 = vadd.f32 0.0, %v103
    %105 = vmatmul.f32.gmra.mxu0 %v84
    %v106 = vpop.f32.mrf.mxu0
    %v107 = vadd.f32 0.0, %v106
    %108 = vdwg.mxu0
    %111 = vrot.lane.b32.xlu0 %v104, 4
    %v112 = vpop.permute.xlu0 %111
    %113 = vrot.lane.b32.xlu0 %v107, 4
    %v114 = vpop.permute.xlu0 %113
    %v117 = vsel %vm76, %v64, %v112
    %v118 = vsel %vm76, %v65, %v114
    %vm119 = vcmask 64512
    %120 = vst.msk [vmem:[#allocation2 + $0x2] sm:$0xff] %vm119, %v117
    %121 = vst.msk [vmem:[#allocation2 + $0xa] sm:$0xff] %vm119, %v118
    %v122 = vsel %vm76, %v66, %v104
    %v123 = vsel %vm76, %v67, %v107
    %s124 = scalar_lea.vmem [#allocation2], 24
    %125 = vst.msk [vmem:[%s124 + $0x2] sm:$0xff] %vm119, %v122
    %126 = vst.msk [vmem:[%s124 + $0xa] sm:$0xff] %vm119, %v123
    %v127 = vld [vmem:[#allocation2] sm:$0xff]
    %v128 = vld [vmem:[#allocation2 + $0x8] sm:$0xff]
    %v129 = vld [vmem:[#allocation2 + $0x1] sm:$0xff]
    %v130 = vld [vmem:[#allocation2 + $0x9] sm:$0xff]
    %v131 = vld [vmem:[#allocation2 + $0x2] sm:$0xff]
    %v132 = vld [vmem:[#allocation2 + $0xa] sm:$0xff]
    %v133 = vld [vmem:[#allocation2 + $0x3] sm:$0xff]
    %v134 = vld [vmem:[#allocation2 + $0xb] sm:$0xff]
    %v135 = vld [vmem:[#allocation2 + $0x4] sm:$0xff]
    %v136 = vld [vmem:[#allocation2 + $0xc] sm:$0xff]
    %139 = vrot.lane.b32.xlu0 %v129, 8
    %v140 = vpop.permute.xlu0 %139
    %141 = vrot.lane.b32.xlu0 %v130, 8
    %v142 = vpop.permute.xlu0 %141
    %147 = vrot.lane.b32.xlu0 %v131, 16
    %v148 = vpop.permute.xlu0 %147
    %149 = vrot.lane.b32.xlu0 %v132, 16
    %v150 = vpop.permute.xlu0 %149
    %155 = vrot.lane.b32.xlu0 %v133, 24
    %v156 = vpop.permute.xlu0 %155
    %157 = vrot.lane.b32.xlu0 %v134, 24
    %v158 = vpop.permute.xlu0 %157
    %163 = vrot.lane.b32.xlu0 %v135, 32
    %v164 = vpop.permute.xlu0 %163
    %165 = vrot.lane.b32.xlu0 %v136, 32
    %v166 = vpop.permute.xlu0 %165
    %v169 = vsel %vm119, %v127, %v140
    %v170 = vsel %vm119, %v128, %v142
    %v171 = vsel %vm79, %v169, %v148
    %v172 = vsel %vm79, %v170, %v150
    %vm173 = vcmask 195584
    %v174 = vsel %vm173, %v171, %v156
    %v175 = vsel %vm173, %v172, %v158
    %vm176 = vcmask 261120
    %v177 = vsel %vm176, %v174, %v164
    %v178 = vsel %vm176, %v175, %v166
    %v179 = vld [vmem:[%s124] sm:$0xff]
    %v180 = vld [vmem:[%s124 + $0x8] sm:$0xff]
    %v181 = vld [vmem:[%s124 + $0x1] sm:$0xff]
    %v182 = vld [vmem:[%s124 + $0x9] sm:$0xff]
    %v183 = vld [vmem:[%s124 + $0x2] sm:$0xff]
    %v184 = vld [vmem:[%s124 + $0xa] sm:$0xff]
    %v185 = vld [vmem:[%s124 + $0x3] sm:$0xff]
    %v186 = vld [vmem:[%s124 + $0xb] sm:$0xff]
    %v187 = vld [vmem:[%s124 + $0x4] sm:$0xff]
    %v188 = vld [vmem:[%s124 + $0xc] sm:$0xff]
    %191 = vrot.lane.b32.xlu0 %v181, 8
    %v192 = vpop.permute.xlu0 %191
    %193 = vrot.lane.b32.xlu0 %v182, 8
    %v194 = vpop.permute.xlu0 %193
    %199 = vrot.lane.b32.xlu0 %v183, 16
    %v200 = vpop.permute.xlu0 %199
    %201 = vrot.lane.b32.xlu0 %v184, 16
    %v202 = vpop.permute.xlu0 %201
    %207 = vrot.lane.b32.xlu0 %v185, 24
    %v208 = vpop.permute.xlu0 %207
    %209 = vrot.lane.b32.xlu0 %v186, 24
    %v210 = vpop.permute.xlu0 %209
    %215 = vrot.lane.b32.xlu0 %v187, 32
    %v216 = vpop.permute.xlu0 %215
    %217 = vrot.lane.b32.xlu0 %v188, 32
    %v218 = vpop.permute.xlu0 %217
    %v221 = vsel %vm119, %v179, %v192
    %v222 = vsel %vm119, %v180, %v194
    %v223 = vsel %vm79, %v221, %v200
    %v224 = vsel %vm79, %v222, %v202
    %v225 = vsel %vm173, %v223, %v208
    %v226 = vsel %vm173, %v224, %v210
    %v227 = vsel %vm176, %v225, %v216
    %v228 = vsel %vm176, %v226, %v218
    %v229 = vperm.slane %v32, 0
    %vm230 = vcmask 326656
    %v232 = vsel %vm230, %v177, 0
    %v235 = vsel %vm230, %v178, 0
    %v238 = vsel %vm230, %v227, 0
    %v241 = vsel %vm230, %v228, 0
    %243 = vmatpush.msra.mxu0 0.0
    %244 = vmatpush.msra.mxu0 0.0
    %245 = vmatpush.msra.mxu0 0.0
    %246 = vmatpush.msra.mxu0 0.0
    %247 = vmatpush.msra.mxu0 0.0
    %248 = vmatpush.msra.mxu0 0.0
    %249 = vmatpush.msra.mxu0 0.0
    %250 = vmatpush.msra.mxu0 0.0
    %251 = vmatpush.msra.mxu0 0.0
    %252 = vmatpush.msra.mxu0 0.0
    %253 = vmatpush.msra.mxu0 0.0
    %254 = vmatpush.msra.mxu0 %v31
    %255 = vmatpush.msra.mxu0 %v30
    %256 = vmatpush.msra.mxu0 %v29
    %257 = vmatpush.msra.mxu0 %v28
    %258 = vmatpush.msra.mxu0 %v27
    %259 = vmatmul.f32.gmra.mxu0 %v232
    %v260 = vpop.f32.mrf.mxu0
    %v261 = vadd.f32 %v229, %v260
    %262 = vmatmul.f32.gmra.mxu0 %v235
    %v263 = vpop.f32.mrf.mxu0
    %v264 = vadd.f32 %v229, %v263
    %265 = vmatmul.f32.gmra.mxu0 %v238
    %v266 = vpop.f32.mrf.mxu0
    %v267 = vadd.f32 %v229, %v266
    %268 = vmatmul.f32.gmra.mxu0 %v241
    %v269 = vpop.f32.mrf.mxu0
    %v270 = vadd.f32 %v229, %v269
    %271 = vdwg.mxu0
    %vm272 = vcmp.gt.f32.partialorder %v261, 0.0
    %vm273 = vcmp.gt.f32.partialorder %v264, 0.0
    %vm274 = vcmp.gt.f32.partialorder %v267, 0.0
    %vm275 = vcmp.gt.f32.partialorder %v270, 0.0
    %v276 = vmin.f32 %v261, 0.0
    %v277 = vmin.f32 %v264, 0.0
    %v278 = vmin.f32 %v267, 0.0
    %v279 = vmin.f32 %v270, 0.0
    %v280 = vmul.f32 %v276, 1.442695
    %v281 = vpow.pop %v280
    %v282 = vmul.f32 %v277, 1.442695
    %v283 = vpow.pop %v282
    %v284 = vmul.f32 %v278, 1.442695
    %v285 = vpow.pop %v284
    %v286 = vmul.f32 %v279, 1.442695
    %v287 = vpow.pop %v286
    %v288 = vsub.f32 %v281, 1.0
    %v289 = vsub.f32 %v283, 1.0
    %v290 = vsub.f32 %v285, 1.0
    %v291 = vsub.f32 %v287, 1.0
    %v292 = vsel %vm272, %v261, %v288
    %v293 = vsel %vm273, %v264, %v289
    %v294 = vsel %vm274, %v267, %v290
    %v295 = vsel %vm275, %v270, %v291
    %v296 = vld [vmem:[#allocation3 + $0x30] sm:$0xff]
    %v297 = vld [vmem:[#allocation3 + $0x38] sm:$0xff]
    %v298 = vld [vmem:[#allocation3 + $0x40] sm:$0xff]
    %v299 = vld [vmem:[#allocation3 + $0x48] sm:$0xff]
    %v300 = vld [vmem:[#allocation3 + $0x50] sm:$0xff]
    %v301 = vld [vmem:[#allocation3 + $0x58] sm:$0xff]
    %v302 = vld [vmem:[#allocation3 + $0x60] sm:$0xff]
    %v303 = vld [vmem:[#allocation3 + $0x68] sm:$0xff]
    %v304 = vld [vmem:[#allocation3 + $0x70] sm:$0xff]
    %v305 = vld [vmem:[#allocation3 + $0x78] sm:$0xff]
    %v306 = vld [vmem:[#allocation3 + $0x80] sm:$0xff]
    %v307 = vld [vmem:[#allocation3 + $0x88] sm:$0xff]
    %v308 = vld [vmem:[#allocation3 + $0x90] sm:$0xff]
    %v309 = vld [vmem:[#allocation3 + $0x98] sm:$0xff]
    %v310 = vld [vmem:[#allocation3 + $0xa0] sm:$0xff]
    %v311 = vld [vmem:[#allocation3 + $0xa8] sm:$0xff]
    %v312 = vld [vmem:[#allocation3 + $0xb0] sm:$0xff]
    %v313 = vld [vmem:[#allocation3 + $0xb8] sm:$0xff]
    %v314 = vld [vmem:[#allocation3 + $0xc0] sm:$0xff]
    %v315 = vld [vmem:[#allocation3 + $0xc8] sm:$0xff]
    %v316 = vld [vmem:[#allocation3 + $0xd0] sm:$0xff]
    %v317 = vld [vmem:[#allocation3 + $0xd8] sm:$0xff]
    %v318 = vld [vmem:[#allocation3 + $0xe0] sm:$0xff]
    %v319 = vld [vmem:[#allocation3 + $0xe8] sm:$0xff]
    %v320 = vld [vmem:[#allocation3 + $0xf0] sm:$0xff]
    %v321 = vld [vmem:[#allocation3 + $0xf8] sm:$0xff]
    %v322 = vld [vmem:[#allocation3 + $0x100] sm:$0xff]
    %v323 = vld [vmem:[#allocation3 + $0x108] sm:$0xff]
    %v324 = vld [vmem:[#allocation3 + $0x110] sm:$0xff]
    %v325 = vld [vmem:[#allocation3 + $0x118] sm:$0xff]
    %v326 = vld [vmem:[#allocation3 + $0x120] sm:$0xff]
    %v327 = vld [vmem:[#allocation3 + $0x128] sm:$0xff]
    %v328 = vld [vmem:[#allocation3 + $0x130] sm:$0xff]
    %v329 = vld [vmem:[#allocation3 + $0x138] sm:$0xff]
    %v330 = vld [vmem:[#allocation3 + $0x140] sm:$0xff]
    %v331 = vld [vmem:[#allocation3 + $0x148] sm:$0xff]
    %v332 = vld [vmem:[#allocation3 + $0x150] sm:$0xff]
    %v333 = vld [vmem:[#allocation3 + $0x158] sm:$0xff]
    %v334 = vld [vmem:[#allocation3 + $0x160] sm:$0xff]
    %v335 = vld [vmem:[#allocation3 + $0x168] sm:$0xff]
    %v336 = vld [vmem:[#allocation3 + $0x170] sm:$0xff]
    %v337 = vld [vmem:[#allocation3 + $0x178] sm:$0xff]
    %v338 = vld [vmem:[#allocation3 + $0x180] sm:$0xff]
    %v339 = vld [vmem:[#allocation3 + $0x188] sm:$0xff]
    %v340 = vld [vmem:[#allocation3 + $0x190] sm:$0xff]
    %v341 = vld [vmem:[#allocation3 + $0x198] sm:$0xff]
    %v342 = vld [vmem:[#allocation3 + $0x1a0] sm:$0xff]
    %v343 = vld [vmem:[#allocation3 + $0x1a8] sm:$0xff]
    %v344 = vld [vmem:[#allocation3 + $0x1b0] sm:$0xff]
    %v345 = vld [vmem:[#allocation3 + $0x1b8] sm:$0xff]
    %v346 = vld [vmem:[#allocation3 + $0x1c0] sm:$0xff]
    %v347 = vld [vmem:[#allocation3 + $0x1c8] sm:$0xff]
    %v348 = vld [vmem:[#allocation3 + $0x1d0] sm:$0xff]
    %v349 = vld [vmem:[#allocation3 + $0x1d8] sm:$0xff]
    %v350 = vld [vmem:[#allocation3 + $0x1e0] sm:$0xff]
    %v351 = vld [vmem:[#allocation3 + $0x1e8] sm:$0xff]
    %v352 = vld [vmem:[#allocation3 + $0x1f0] sm:$0xff]
    %v353 = vld [vmem:[#allocation3 + $0x1f8] sm:$0xff]
    %v354 = vld [vmem:[#allocation3 + $0x200] sm:$0xff]
    %v355 = vld [vmem:[#allocation3 + $0x208] sm:$0xff]
    %v356 = vld [vmem:[#allocation3 + $0x210] sm:$0x1]
    %357 = vst.msk [vmem:[#allocation2 + $0x2] sm:$0xff] %vm48, %v292
    %358 = vst.msk [vmem:[#allocation2 + $0xa] sm:$0xff] %vm48, %v293
    %359 = vst.msk [vmem:[%s124 + $0x2] sm:$0xff] %vm48, %v294
    %360 = vst.msk [vmem:[%s124 + $0xa] sm:$0xff] %vm48, %v295
    %v361 = vld [vmem:[#allocation2] sm:$0xff]
    %v362 = vld [vmem:[#allocation2 + $0x8] sm:$0xff]
    %v363 = vld [vmem:[#allocation2 + $0x1] sm:$0xff]
    %v364 = vld [vmem:[#allocation2 + $0x9] sm:$0xff]
    %v365 = vld [vmem:[#allocation2 + $0x2] sm:$0xff]
    %v366 = vld [vmem:[#allocation2 + $0xa] sm:$0xff]
    %v367 = vld [vmem:[#allocation2 + $0x3] sm:$0xff]
    %v368 = vld [vmem:[#allocation2 + $0xb] sm:$0xff]
    %v369 = vld [vmem:[#allocation2 + $0x4] sm:$0xff]
    %v370 = vld [vmem:[#allocation2 + $0xc] sm:$0xff]
    %373 = vrot.lane.b32.xlu0 %v363, 96
    %v374 = vpop.permute.xlu0 %373
    %375 = vrot.lane.b32.xlu0 %v364, 96
    %v376 = vpop.permute.xlu0 %375
    %381 = vrot.lane.b32.xlu0 %v365, 64
    %v382 = vpop.permute.xlu0 %381
    %383 = vrot.lane.b32.xlu0 %v366, 64
    %v384 = vpop.permute.xlu0 %383
    %389 = vrot.lane.b32.xlu0 %v367, 32
    %v390 = vpop.permute.xlu0 %389
    %391 = vrot.lane.b32.xlu0 %v368, 32
    %v392 = vpop.permute.xlu0 %391
    %v395 = vsel %vm48, %v361, %v374
    %v396 = vsel %vm48, %v362, %v376
    %vm397 = vcmask 523264
    %v398 = vsel %vm397, %v374, %v382
    %v399 = vsel %vm397, %v376, %v384
    %v400 = vsel %vm176, %v382, %v390
    %v401 = vsel %vm176, %v384, %v392
    %v402 = vld [vmem:[%s124] sm:$0xff]
    %v403 = vld [vmem:[%s124 + $0x8] sm:$0xff]
    %v404 = vld [vmem:[%s124 + $0x1] sm:$0xff]
    %v405 = vld [vmem:[%s124 + $0x9] sm:$0xff]
    %v406 = vld [vmem:[%s124 + $0x2] sm:$0xff]
    %v407 = vld [vmem:[%s124 + $0xa] sm:$0xff]
    %v408 = vld [vmem:[%s124 + $0x3] sm:$0xff]
    %v409 = vld [vmem:[%s124 + $0xb] sm:$0xff]
    %v410 = vld [vmem:[%s124 + $0x4] sm:$0xff]
    %v411 = vld [vmem:[%s124 + $0xc] sm:$0xff]
    %414 = vrot.lane.b32.xlu0 %v404, 96
    %v415 = vpop.permute.xlu0 %414
    %416 = vrot.lane.b32.xlu0 %v405, 96
    %v417 = vpop.permute.xlu0 %416
    %422 = vrot.lane.b32.xlu0 %v406, 64
    %v423 = vpop.permute.xlu0 %422
    %424 = vrot.lane.b32.xlu0 %v407, 64
    %v425 = vpop.permute.xlu0 %424
    %430 = vrot.lane.b32.xlu0 %v408, 32
    %v431 = vpop.permute.xlu0 %430
    %432 = vrot.lane.b32.xlu0 %v409, 32
    %v433 = vpop.permute.xlu0 %432
    %v436 = vsel %vm48, %v402, %v415
    %v437 = vsel %vm48, %v403, %v417
    %v438 = vsel %vm397, %v415, %v423
    %v439 = vsel %vm397, %v417, %v425
    %v440 = vsel %vm176, %v423, %v431
    %v441 = vsel %vm176, %v425, %v433
    %v442 = vperm.slane %v356, 0
    %v444 = vsel %vm48, %v369, 0
    %v447 = vsel %vm48, %v370, 0
    %v450 = vsel %vm48, %v410, 0
    %v453 = vsel %vm48, %v411, 0
    %455 = vmatpush.msra.mxu0 %v311
    %456 = vmatpush.msra.mxu0 %v310
    %457 = vmatpush.msra.mxu0 %v309
    %458 = vmatpush.msra.mxu0 %v308
    %459 = vmatpush.msra.mxu0 %v307
    %460 = vmatpush.msra.mxu0 %v306
    %461 = vmatpush.msra.mxu0 %v305
    %462 = vmatpush.msra.mxu0 %v304
    %463 = vmatpush.msra.mxu0 %v303
    %464 = vmatpush.msra.mxu0 %v302
    %465 = vmatpush.msra.mxu0 %v301
    %466 = vmatpush.msra.mxu0 %v300
    %467 = vmatpush.msra.mxu0 %v299
    %468 = vmatpush.msra.mxu0 %v298
    %469 = vmatpush.msra.mxu0 %v297
    %470 = vmatpush.msra.mxu0 %v296
    %471 = vmatmul.f32.gmra.mxu0 %v395
    %v472 = vpop.f32.mrf.mxu0
    %v473 = vadd.f32 %v442, %v472
    %474 = vmatmul.f32.gmra.mxu0 %v396
    %v475 = vpop.f32.mrf.mxu0
    %v476 = vadd.f32 %v442, %v475
    %477 = vmatmul.f32.gmra.mxu0 %v436
    %v478 = vpop.f32.mrf.mxu0
    %v479 = vadd.f32 %v442, %v478
    %480 = vmatmul.f32.gmra.mxu0 %v437
    %v481 = vpop.f32.mrf.mxu0
    %v482 = vadd.f32 %v442, %v481
    %483 = vdwg.mxu0
    %484 = vmatpush.msra.mxu0 %v327
    %485 = vmatpush.msra.mxu0 %v326
    %486 = vmatpush.msra.mxu0 %v325
    %487 = vmatpush.msra.mxu0 %v324
    %488 = vmatpush.msra.mxu0 %v323
    %489 = vmatpush.msra.mxu0 %v322
    %490 = vmatpush.msra.mxu0 %v321
    %491 = vmatpush.msra.mxu0 %v320
    %492 = vmatpush.msra.mxu0 %v319
    %493 = vmatpush.msra.mxu0 %v318
    %494 = vmatpush.msra.mxu0 %v317
    %495 = vmatpush.msra.mxu0 %v316
    %496 = vmatpush.msra.mxu0 %v315
    %497 = vmatpush.msra.mxu0 %v314
    %498 = vmatpush.msra.mxu0 %v313
    %499 = vmatpush.msra.mxu0 %v312
    %500 = vmatmul.f32.gmra.mxu0 %v398
    %v501 = vpop.f32.mrf.mxu0
    %v502 = vadd.f32 %v473, %v501
    %503 = vmatmul.f32.gmra.mxu0 %v399
    %v504 = vpop.f32.mrf.mxu0
    %v505 = vadd.f32 %v476, %v504
    %506 = vmatmul.f32.gmra.mxu0 %v438
    %v507 = vpop.f32.mrf.mxu0
    %v508 = vadd.f32 %v479, %v507
    %509 = vmatmul.f32.gmra.mxu0 %v439
    %v510 = vpop.f32.mrf.mxu0
    %v511 = vadd.f32 %v482, %v510
    %512 = vdwg.mxu0
    %513 = vmatpush.msra.mxu0 %v343
    %514 = vmatpush.msra.mxu0 %v342
    %515 = vmatpush.msra.mxu0 %v341
    %516 = vmatpush.msra.mxu0 %v340
    %517 = vmatpush.msra.mxu0 %v339
    %518 = vmatpush.msra.mxu0 %v338
    %519 = vmatpush.msra.mxu0 %v337
    %520 = vmatpush.msra.mxu0 %v336
    %521 = vmatpush.msra.mxu0 %v335
    %522 = vmatpush.msra.mxu0 %v334
    %523 = vmatpush.msra.mxu0 %v333
    %524 = vmatpush.msra.mxu0 %v332
    %525 = vmatpush.msra.mxu0 %v331
    %526 = vmatpush.msra.mxu0 %v330
    %527 = vmatpush.msra.mxu0 %v329
    %528 = vmatpush.msra.mxu0 %v328
    %529 = vmatmul.f32.gmra.mxu0 %v400
    %v530 = vpop.f32.mrf.mxu0
    %v531 = vadd.f32 %v502, %v530
    %532 = vmatmul.f32.gmra.mxu0 %v401
    %v533 = vpop.f32.mrf.mxu0
    %v534 = vadd.f32 %v505, %v533
    %535 = vmatmul.f32.gmra.mxu0 %v440
    %v536 = vpop.f32.mrf.mxu0
    %v537 = vadd.f32 %v508, %v536
    %538 = vmatmul.f32.gmra.mxu0 %v441
    %v539 = vpop.f32.mrf.mxu0
    %v540 = vadd.f32 %v511, %v539
    %541 = vdwg.mxu0
    %542 = vmatpush.msra.mxu0 0.0
    %543 = vmatpush.msra.mxu0 0.0
    %544 = vmatpush.msra.mxu0 0.0
    %545 = vmatpush.msra.mxu0 0.0
    %546 = vmatpush.msra.mxu0 %v355
    %547 = vmatpush.msra.mxu0 %v354
    %548 = vmatpush.msra.mxu0 %v353
    %549 = vmatpush.msra.mxu0 %v352
    %550 = vmatpush.msra.mxu0 %v351
    %551 = vmatpush.msra.mxu0 %v350
    %552 = vmatpush.msra.mxu0 %v349
    %553 = vmatpush.msra.mxu0 %v348
    %554 = vmatpush.msra.mxu0 %v347
    %555 = vmatpush.msra.mxu0 %v346
    %556 = vmatpush.msra.mxu0 %v345
    %557 = vmatpush.msra.mxu0 %v344
    %558 = vmatmul.f32.gmra.mxu0 %v444
    %v559 = vpop.f32.mrf.mxu0
    %v560 = vadd.f32 %v531, %v559
    %561 = vmatmul.f32.gmra.mxu0 %v447
    %v562 = vpop.f32.mrf.mxu0
    %v563 = vadd.f32 %v534, %v562
    %564 = vmatmul.f32.gmra.mxu0 %v450
    %v565 = vpop.f32.mrf.mxu0
    %v566 = vadd.f32 %v537, %v565
    %567 = vmatmul.f32.gmra.mxu0 %v453
    %v568 = vpop.f32.mrf.mxu0
    %v569 = vadd.f32 %v540, %v568
    %570 = vdwg.mxu0
    %vm571 = vcmp.gt.f32.partialorder %v560, 0.0
    %vm572 = vcmp.gt.f32.partialorder %v563, 0.0
    %vm573 = vcmp.gt.f32.partialorder %v566, 0.0
    %vm574 = vcmp.gt.f32.partialorder %v569, 0.0
    %v575 = vmin.f32 %v560, 0.0
    %v576 = vmin.f32 %v563, 0.0
    %v577 = vmin.f32 %v566, 0.0
    %v578 = vmin.f32 %v569, 0.0
    %v579 = vmul.f32 %v575, 1.442695
    %v580 = vpow.pop %v579
    %v581 = vmul.f32 %v576, 1.442695
    %v582 = vpow.pop %v581
    %v583 = vmul.f32 %v577, 1.442695
    %v584 = vpow.pop %v583
    %v585 = vmul.f32 %v578, 1.442695
    %v586 = vpow.pop %v585
    %v587 = vsub.f32 %v580, 1.0
    %v588 = vsub.f32 %v582, 1.0
    %v589 = vsub.f32 %v584, 1.0
    %v590 = vsub.f32 %v586, 1.0
    %v591 = vsel %vm571, %v560, %v587
    %v592 = vsel %vm572, %v563, %v588
    %v593 = vsel %vm573, %v566, %v589
    %v594 = vsel %vm574, %v569, %v590
    %v595 = vperm.slane %v45, 0
    %v597 = vsel %vm48, %v591, 0
    %v600 = vsel %vm48, %v592, 0
    %v603 = vsel %vm48, %v593, 0
    %v606 = vsel %vm48, %v594, 0
    %608 = vmatpush.msra.mxu0 0.0
    %609 = vmatpush.msra.mxu0 0.0
    %610 = vmatpush.msra.mxu0 0.0
    %611 = vmatpush.msra.mxu0 0.0
    %612 = vmatpush.msra.mxu0 %v44
    %613 = vmatpush.msra.mxu0 %v43
    %614 = vmatpush.msra.mxu0 %v42
    %615 = vmatpush.msra.mxu0 %v41
    %616 = vmatpush.msra.mxu0 %v40
    %617 = vmatpush.msra.mxu0 %v39
    %618 = vmatpush.msra.mxu0 %v38
    %619 = vmatpush.msra.mxu0 %v37
    %620 = vmatpush.msra.mxu0 %v36
    %621 = vmatpush.msra.mxu0 %v35
    %622 = vmatpush.msra.mxu0 %v34
    %623 = vmatpush.msra.mxu0 %v33
    %624 = vmatmul.f32.gmra.mxu0 %v597
    %v625 = vpop.f32.mrf.mxu0
    %v626 = vadd.f32 %v595, %v625
    %627 = vmatmul.f32.gmra.mxu0 %v600
    %v628 = vpop.f32.mrf.mxu0
    %v629 = vadd.f32 %v595, %v628
    %630 = vmatmul.f32.gmra.mxu0 %v603
    %v631 = vpop.f32.mrf.mxu0
    %v632 = vadd.f32 %v595, %v631
    %633 = vmatmul.f32.gmra.mxu0 %v606
    %v634 = vpop.f32.mrf.mxu0
    %v635 = vadd.f32 %v595, %v634
    %636 = vdwg.mxu0
    %vm637 = vcmp.gt.f32.partialorder %v626, 0.0
    %vm638 = vcmp.gt.f32.partialorder %v629, 0.0
    %vm639 = vcmp.gt.f32.partialorder %v632, 0.0
    %vm640 = vcmp.gt.f32.partialorder %v635, 0.0
    %v641 = vmin.f32 %v626, 0.0
    %v642 = vmin.f32 %v629, 0.0
    %v643 = vmin.f32 %v632, 0.0
    %v644 = vmin.f32 %v635, 0.0
    %v645 = vmul.f32 %v641, 1.442695
    %v646 = vpow.pop %v645
    %v647 = vmul.f32 %v642, 1.442695
    %v648 = vpow.pop %v647
    %v649 = vmul.f32 %v643, 1.442695
    %v650 = vpow.pop %v649
    %v651 = vmul.f32 %v644, 1.442695
    %v652 = vpow.pop %v651
    %v653 = vsub.f32 %v646, 1.0
    %v654 = vsub.f32 %v648, 1.0
    %v655 = vsub.f32 %v650, 1.0
    %v656 = vsub.f32 %v652, 1.0
    %v657 = vsel %vm637, %v626, %v653
    %v658 = vsel %vm638, %v629, %v654
    %v659 = vsel %vm639, %v632, %v655
    %v660 = vsel %vm640, %v635, %v656
    %vm661 = vcmask 23552
    %v662 = vsel %vm661, %v657, 0.0
    %v663 = vsel %vm661, %v658, 0.0
    %v664 = vadd.f32 %v662, %v663
    %v665 = vsel %vm661, %v659, 0.0
    %v666 = vadd.f32 %v664, %v665
    %v667 = vsel %vm661, %v660, 0.0
    %v668 = vadd.f32 %v666, %v667
    %669 = vadd.xlane.f32.xlu0 %v668
    %v670 = vpop.xlane.xlu0 %669
    %v671 = vrot.slane %v670, 4
    %v672 = vadd.f32 %v670, %v671
    %v673 = vrot.slane %v672, 2
    %v674 = vadd.f32 %v672, %v673
    %v675 = vrot.slane %v674, 1
    %v676 = vadd.f32 %v674, %v675
    %s677 = vtos %v676
    %v678 = vrcp.pop 96.0
    %v679 = vmul.f32 96.0, %v678
    %v680 = vsub.f32 1.0, %v679
    %v681 = vmul.f32 %v678, %v680
    %v682 = vadd.f32 %v678, %v681
    %vm683 = vweird.f32 %v678
    %v684 = vsel %vm683, %v678, %v682
    %s685 = vtos %v684
    %s686 = smul.f32 %s677, %s685
    %v687 = vstv %s686
    %v688 = vsub.f32 %v657, %v687
    %v689 = vsub.f32 %v658, %v687
    %v690 = vsub.f32 %v659, %v687
    %v691 = vsub.f32 %v660, %v687
    %v692 = vmul.f32 %v688, %v688
    %v693 = vmul.f32 %v689, %v689
    %v694 = vmul.f32 %v690, %v690
    %v695 = vmul.f32 %v691, %v691
    %v696 = vsel %vm661, %v692, 0.0
    %v697 = vsel %vm661, %v693, 0.0
    %v698 = vadd.f32 %v696, %v697
    %v699 = vsel %vm661, %v694, 0.0
    %v700 = vadd.f32 %v698, %v699
    %v701 = vsel %vm661, %v695, 0.0
    %v702 = vadd.f32 %v700, %v701
    %703 = vadd.xlane.f32.xlu0 %v702
    %v704 = vpop.xlane.xlu0 %703
    %v705 = vrot.slane %v704, 4
    %v706 = vadd.f32 %v704, %v705
    %v707 = vrot.slane %v706, 2
    %v708 = vadd.f32 %v706, %v707
    %v709 = vrot.slane %v708, 1
    %v710 = vadd.f32 %v708, %v709
    %s711 = vtos %v710
    %v712 = vrcp.pop 95.0
    %v713 = vmul.f32 95.0, %v712
    %v714 = vsub.f32 1.0, %v713
    %v715 = vmul.f32 %v712, %v714
    %v716 = vadd.f32 %v712, %v715
    %vm717 = vweird.f32 %v712
    %v718 = vsel %vm717, %v712, %v716
    %s719 = vtos %v718
    %s720 = smul.f32 %s711, %s719
    %v721 = vstv %s720
    %v722 = vrsqrt.pop %v721
    %v723 = vmul.f32 %v722, %v721
    %v724 = vmul.f32 %v723, %v722
    %v725 = vmul.f32 0.5, %v724
    %v726 = vsub.f32 1.5, %v725
    %v727 = vmul.f32 %v722, %v726
    %vm728 = vweird.f32 %v721
    %vm729 = vweird.f32 %v722
    %vm730 = vmor %vm728, %vm729
    %v731 = vsel %vm730, %v722, %v727
    %s732 = vtos %v731
    %v733 = vstv %s732
    %v734 = vmul.f32 %v688, %v733
    %v735 = vmul.f32 %v689, %v733
    %v736 = vmul.f32 %v690, %v733
    %v737 = vmul.f32 %v691, %v733
    %738 = vst.msk [vmem:[%s2] sm:$0xff] %vm661, %v734
    %739 = vst.msk [vmem:[%s2 + $0x8] sm:$0xff] %vm661, %v735
    %s740 = scalar_lea.vmem %s2, 16
    %741 = vst.msk [vmem:[%s740] sm:$0xff] %vm661, %v736
    %742 = vst.msk [vmem:[%s740 + $0x8] sm:$0xff] %vm661, %v737
    // Predicated region
    $region14: #{enc_intercnn_forward.1} parent=1 // pred_check
      _
    $region15: #{enc_intercnn_forward.1} parent=1 // pred_check_branch
      %744 = sbr.rel (0) target = $region17
    $region16: #{enc_intercnn_forward.1} parent=1 // pred_region
      _
    $region17: #{enc_intercnn_forward.1} parent=1 // pred_fallthru
      _
    // Predicated region
    $region18: #{enc_intercnn_forward.1} parent=1 // pred_check
      _
    $region19: #{enc_intercnn_forward.1} parent=1 // pred_check_branch
      %746 = sbr.rel (0) target = $region21
    $region20: #{enc_intercnn_forward.1} parent=1 // pred_region
      _
    $region21: #{enc_intercnn_forward.1} parent=1 // pred_fallthru
      _
    %747 = vsyncpa [#allocation4], 1

</llo_original>
